<compile_context>
chip_gen: v7x
topology: tpu7x:2x2x1
jax: 0.10.0
libtpu: 0.0.40
codegen_flags: <defaults>
</compile_context>

<pallas_src>
import functools

import jax
import jax.numpy as jnp
from jax.experimental import pallas as pl
from jax.experimental.pallas import tpu as pltpu


_SQRT_HALF = 0.7071067811865476


def _erf_poly(z):
    # Abramowitz & Stegun 7.1.26 rational approximation (max abs err ~1.5e-7),
    # built only from ops with guaranteed Mosaic lowerings (abs/mul/add/exp/where).
    p = 0.3275911
    a1, a2, a3, a4, a5 = (0.254829592, -0.284496736, 1.421413741,
                          -1.453152027, 1.061405429)
    az = jnp.abs(z)
    t = 1.0 / (1.0 + p * az)
    poly = ((((a5 * t + a4) * t + a3) * t + a2) * t + a1) * t
    y = 1.0 - poly * jnp.exp(-az * az)
    return jnp.where(z < 0.0, -y, y)


def _gelu_exact(x):
    # Matches torch.nn.GELU() default (approximate='none'): 0.5*x*(1+erf(x/sqrt(2)))
    return 0.5 * x * (1.0 + _erf_poly(x * _SQRT_HALF))


def _ffn_kernel(x_ref, w1_ref, b1_ref, w2_ref, b2_ref, o_ref, *, matmul_dtype):
    # x_ref:  (tm, E)     row tile of flattened (B*T, E) input
    # w1_ref: (E, 4E), b1_ref: (1, 4E)
    # w2_ref: (4E, E), b2_ref: (1, E)
    # o_ref:  (tm, E)
    x = x_ref[...]
    w1 = w1_ref[...]
    w2 = w2_ref[...]
    if matmul_dtype is not None:                      # optional bf16 MXU path
        x = x.astype(matmul_dtype)
        w1 = w1.astype(matmul_dtype)
        w2 = w2.astype(matmul_dtype)

    h = jnp.dot(x, w1, preferred_element_type=jnp.float32) + b1_ref[...]
    h = _gelu_exact(h)                                # f32 elementwise (VPU/EUP)

    if matmul_dtype is not None:
        h = h.astype(matmul_dtype)
    y = jnp.dot(h, w2, preferred_element_type=jnp.float32) + b2_ref[...]
    o_ref[...] = y.astype(o_ref.dtype)


def feed_forward_net(x, w1, b1, w2, b2, *, row_tile=256, matmul_dtype=None):
    """Fused FFN forward.

    x : (..., E) float32
    w1: (E, 4E)  -- transpose of PyTorch nn.Linear.weight (done once, outside)
    b1: (4E,)
    w2: (4E, E)
    b2: (E,)
    """
    orig_shape = x.shape
    E = orig_shape[-1]
    Hid = w1.shape[1]

    M = 1
    for d in orig_shape[:-1]:
        M *= int(d)
    x2 = x.reshape(M, E)
    b1_2 = b1.reshape(1, Hid)
    b2_2 = b2.reshape(1, E)

    # Row tiling: single grid step for small problems, 8-aligned tiles otherwise.
    tm = min(row_tile, M)
    n_blocks = pl.cdiv(M, tm)
    Mp = n_blocks * tm
    if Mp != M:
        x2 = jnp.pad(x2, ((0, Mp - M), (0, 0)))

    kernel = functools.partial(_ffn_kernel, matmul_dtype=matmul_dtype)

    out = pl.pallas_call(
        kernel,
        out_shape=jax.ShapeDtypeStruct((Mp, E), x.dtype),
        grid_spec=pltpu.PrefetchScalarGridSpec(
            num_scalar_prefetch=0,
            grid=(n_blocks,),
            in_specs=[
                pl.BlockSpec((tm, E), lambda i: (i, 0)),    # x rows
                pl.BlockSpec((E, Hid), lambda i: (0, 0)),   # W1 (whole)
                pl.BlockSpec((1, Hid), lambda i: (0, 0)),   # b1
                pl.BlockSpec((Hid, E), lambda i: (0, 0)),   # W2 (whole)
                pl.BlockSpec((1, E), lambda i: (0, 0)),     # b2
            ],
            out_specs=pl.BlockSpec((tm, E), lambda i: (i, 0)),
        ),
        compiler_params=pltpu.CompilerParams(
            dimension_semantics=("parallel",),
        ),
    )(x2, w1, b1_2, w2, b2_2)

    return out[:M].reshape(orig_shape)


def reference(x, w1, b1, w2, b2):
    h = x @ w1 + b1
    h = jax.nn.gelu(h, approximate=False)   # exact (erf) GELU, like torch default
    return h @ w2 + b2


if __name__ == "__main__":
    # Config implied by the module: n_embed=32 -> hidden=128; batch=2, seq=8.
    B, T, E = 2, 8, 32
    Hid = 4 * E  # 128

    key = jax.random.PRNGKey(0)
    kx, k1, kb1, k2, kb2 = jax.random.split(key, 5)

    x = jax.random.normal(kx, (B, T, E), dtype=jnp.float32)

    # Deterministic nn.Linear-like init, stored (in_features, out_features).
    bound1 = 1.0 / (E ** 0.5)
    bound2 = 1.0 / (Hid ** 0.5)
    w1 = jax.random.uniform(k1, (E, Hid), jnp.float32, -bound1, bound1)
    b1 = jax.random.uniform(kb1, (Hid,), jnp.float32, -bound1, bound1)
    w2 = jax.random.uniform(k2, (Hid, E), jnp.float32, -bound2, bound2)
    b2 = jax.random.uniform(kb2, (E,), jnp.float32, -bound2, bound2)

    out = feed_forward_net(x, w1, b1, w2, b2)
    out = jax.block_until_ready(out)

    ref = reference(x, w1, b1, w2, b2)
    assert out.shape == (B, T, E)
    assert jnp.allclose(out, ref, atol=1e-4, rtol=1e-4), "mismatch vs reference"

    print("KERNEL_OK")
</pallas_src>

<mosaic_0001>
module attributes {stable_mosaic.version = 11 : i64} {
  func.func @_ffn_kernel(%arg0: i32, %arg1: memref<16x32xf32, #tpu.memory_space<vmem>>, %arg2: memref<32x128xf32, #tpu.memory_space<vmem>>, %arg3: memref<1x128xf32, #tpu.memory_space<vmem>>, %arg4: memref<128x32xf32, #tpu.memory_space<vmem>>, %arg5: memref<1x32xf32, #tpu.memory_space<vmem>>, %arg6: memref<16x32xf32, #tpu.memory_space<vmem>>) attributes {dimension_semantics = [#tpu.dimension_semantics<parallel>], iteration_bounds = array<i64: 1>, scalar_prefetch = 0 : i64, scratch_operands = 0 : i64, tpu.core_type = #tpu.core_type<tc>, window_params = [{transform_indices = @transform_0, window_bounds = array<i64: 16, 32>}, {pipeline_mode = #tpu.pipeline_mode<synchronous>, transform_indices = @transform_1, window_bounds = array<i64: 32, 128>}, {pipeline_mode = #tpu.pipeline_mode<synchronous>, transform_indices = @transform_2, window_bounds = array<i64: 1, 128>}, {pipeline_mode = #tpu.pipeline_mode<synchronous>, transform_indices = @transform_3, window_bounds = array<i64: 128, 32>}, {pipeline_mode = #tpu.pipeline_mode<synchronous>, transform_indices = @transform_4, window_bounds = array<i64: 1, 32>}, {transform_indices = @transform_5, window_bounds = array<i64: 16, 32>}]} {
    %c0 = arith.constant 0 : index
    %c0_0 = arith.constant 0 : index
    %0 = vector.load %arg1[%c0, %c0_0] : memref<16x32xf32, #tpu.memory_space<vmem>>, vector<16x32xf32>
    %c0_1 = arith.constant 0 : index
    %c0_2 = arith.constant 0 : index
    %1 = vector.load %arg2[%c0_1, %c0_2] : memref<32x128xf32, #tpu.memory_space<vmem>>, vector<32x128xf32>
    %c0_3 = arith.constant 0 : index
    %c0_4 = arith.constant 0 : index
    %2 = vector.load %arg4[%c0_3, %c0_4] : memref<128x32xf32, #tpu.memory_space<vmem>>, vector<128x32xf32>
    %cst = arith.constant dense<0.000000e+00> : vector<16x128xf32>
    %3 = tpu.matmul %0, %1, %cst {dimension_numbers = #tpu.dot_dimension_numbers<[1], [0], [0], [1], [0, 0, 1, 1], [], []>} : vector<16x32xf32>, vector<32x128xf32>, vector<16x128xf32> -> vector<16x128xf32>
    %c0_5 = arith.constant 0 : index
    %c0_6 = arith.constant 0 : index
    %4 = vector.load %arg3[%c0_5, %c0_6] : memref<1x128xf32, #tpu.memory_space<vmem>>, vector<1x128xf32>
    %5 = vector.broadcast %4 : vector<1x128xf32> to vector<16x128xf32>
    %6 = arith.addf %3, %5 : vector<16x128xf32>
    %cst_7 = arith.constant 5.000000e-01 : f32
    %7 = vector.broadcast %cst_7 : f32 to vector<16x128xf32>
    %8 = arith.mulf %7, %6 : vector<16x128xf32>
    %cst_8 = arith.constant 0.707106769 : f32
    %9 = vector.broadcast %cst_8 : f32 to vector<16x128xf32>
    %10 = arith.mulf %6, %9 : vector<16x128xf32>
    %11 = math.absf %10 : vector<16x128xf32>
    %cst_9 = arith.constant 0.327591091 : f32
    %12 = vector.broadcast %cst_9 : f32 to vector<16x128xf32>
    %13 = arith.mulf %12, %11 : vector<16x128xf32>
    %cst_10 = arith.constant 1.000000e+00 : f32
    %14 = vector.broadcast %cst_10 : f32 to vector<16x128xf32>
    %15 = arith.addf %14, %13 : vector<16x128xf32>
    %cst_11 = arith.constant 1.000000e+00 : f32
    %16 = vector.broadcast %cst_11 : f32 to vector<16x128xf32>
    %17 = arith.divf %16, %15 : vector<16x128xf32>
    %cst_12 = arith.constant 1.06140542 : f32
    %18 = vector.broadcast %cst_12 : f32 to vector<16x128xf32>
    %19 = arith.mulf %18, %17 : vector<16x128xf32>
    %cst_13 = arith.constant -1.45315206 : f32
    %20 = vector.broadcast %cst_13 : f32 to vector<16x128xf32>
    %21 = arith.addf %19, %20 : vector<16x128xf32>
    %22 = arith.mulf %21, %17 : vector<16x128xf32>
    %cst_14 = arith.constant 1.42141378 : f32
    %23 = vector.broadcast %cst_14 : f32 to vector<16x128xf32>
    %24 = arith.addf %22, %23 : vector<16x128xf32>
    %25 = arith.mulf %24, %17 : vector<16x128xf32>
    %cst_15 = arith.constant -0.284496725 : f32
    %26 = vector.broadcast %cst_15 : f32 to vector<16x128xf32>
    %27 = arith.addf %25, %26 : vector<16x128xf32>
    %28 = arith.mulf %27, %17 : vector<16x128xf32>
    %cst_16 = arith.constant 0.254829586 : f32
    %29 = vector.broadcast %cst_16 : f32 to vector<16x128xf32>
    %30 = arith.addf %28, %29 : vector<16x128xf32>
    %31 = arith.mulf %30, %17 : vector<16x128xf32>
    %cst_17 = arith.constant 0.000000e+00 : f32
    %32 = vector.broadcast %cst_17 : f32 to vector<16x128xf32>
    %33 = arith.subf %32, %11 : vector<16x128xf32>
    %34 = arith.mulf %33, %11 : vector<16x128xf32>
    %35 = math.exp %34 : vector<16x128xf32>
    %36 = arith.mulf %31, %35 : vector<16x128xf32>
    %cst_18 = arith.constant 1.000000e+00 : f32
    %37 = vector.broadcast %cst_18 : f32 to vector<16x128xf32>
    %38 = arith.subf %37, %36 : vector<16x128xf32>
    %cst_19 = arith.constant 0.000000e+00 : f32
    %39 = vector.broadcast %cst_19 : f32 to vector<16x128xf32>
    %40 = arith.cmpf olt, %10, %39 : vector<16x128xf32>
    %cst_20 = arith.constant 0.000000e+00 : f32
    %41 = vector.broadcast %cst_20 : f32 to vector<16x128xf32>
    %42 = arith.subf %41, %38 : vector<16x128xf32>
    %43 = arith.select %40, %42, %38 : vector<16x128xi1>, vector<16x128xf32>
    %cst_21 = arith.constant 1.000000e+00 : f32
    %44 = vector.broadcast %cst_21 : f32 to vector<16x128xf32>
    %45 = arith.addf %44, %43 : vector<16x128xf32>
    %46 = arith.mulf %8, %45 : vector<16x128xf32>
    %cst_22 = arith.constant dense<0.000000e+00> : vector<16x32xf32>
    %47 = tpu.matmul %46, %2, %cst_22 {dimension_numbers = #tpu.dot_dimension_numbers<[1], [0], [0], [1], [0, 0, 1, 1], [], []>} : vector<16x128xf32>, vector<128x32xf32>, vector<16x32xf32> -> vector<16x32xf32>
    %c0_23 = arith.constant 0 : index
    %c0_24 = arith.constant 0 : index
    %48 = vector.load %arg5[%c0_23, %c0_24] : memref<1x32xf32, #tpu.memory_space<vmem>>, vector<1x32xf32>
    %49 = vector.broadcast %48 : vector<1x32xf32> to vector<16x32xf32>
    %50 = arith.addf %47, %49 : vector<16x32xf32>
    %c0_25 = arith.constant 0 : index
    %c0_26 = arith.constant 0 : index
    %51 = vector.load %arg6[%c0_25, %c0_26] : memref<16x32xf32, #tpu.memory_space<vmem>>, vector<16x32xf32>
    tpu.vector_store %arg6[%c0_25, %c0_26], %50 {strides = array<i32>} : memref<16x32xf32, #tpu.memory_space<vmem>>, vector<16x32xf32>,
    return
  }
  func.func @transform_0(%arg0: i32) -> (i32, i32) {
    %c0_i32 = arith.constant 0 : i32
    %c0_i32_0 = arith.constant 0 : i32
    return %arg0, %c0_i32 : i32, i32
  }
  func.func @transform_1(%arg0: i32) -> (i32, i32) {
    %c0_i32 = arith.constant 0 : i32
    %c0_i32_0 = arith.constant 0 : i32
    %c0_i32_1 = arith.constant 0 : i32
    return %c0_i32, %c0_i32_0 : i32, i32
  }
  func.func @transform_2(%arg0: i32) -> (i32, i32) {
    %c0_i32 = arith.constant 0 : i32
    %c0_i32_0 = arith.constant 0 : i32
    %c0_i32_1 = arith.constant 0 : i32
    return %c0_i32, %c0_i32_0 : i32, i32
  }
  func.func @transform_3(%arg0: i32) -> (i32, i32) {
    %c0_i32 = arith.constant 0 : i32
    %c0_i32_0 = arith.constant 0 : i32
    %c0_i32_1 = arith.constant 0 : i32
    return %c0_i32, %c0_i32_0 : i32, i32
  }
  func.func @transform_4(%arg0: i32) -> (i32, i32) {
    %c0_i32 = arith.constant 0 : i32
    %c0_i32_0 = arith.constant 0 : i32
    %c0_i32_1 = arith.constant 0 : i32
    return %c0_i32, %c0_i32_0 : i32, i32
  }
  func.func @transform_5(%arg0: i32) -> (i32, i32) {
    %c0_i32 = arith.constant 0 : i32
    %c0_i32_0 = arith.constant 0 : i32
    return %arg0, %c0_i32 : i32, i32
  }
}

</mosaic_0001>

<llo_original>
// kernel: tpu_custom_call.1
$region0: #{tpu_custom_call.1}
  #allocation0 [shape = 'u32[]', space=smem, size = 0x4, offset = 0x4, fixed_abs, tag = 'smem constant byte address 0x4 - core index']
  #allocation1 [shape = 'u32[144,128]{1,0:T(1,128)}', space=vmem, size = 0x12000, scoped, tag = 'internal scratch']
  %s0 = inlined_call_operand.vmem [shape: f32[16,32], index: 0, kind: input, shape index: {}]
  %s1 = inlined_call_operand.vmem [shape: f32[32,128], index: 1, kind: input, shape index: {}]
  %s2 = inlined_call_operand.vmem [shape: f32[1,128], index: 2, kind: input, shape index: {}]
  %s3 = inlined_call_operand.vmem [shape: f32[128,32], index: 3, kind: input, shape index: {}]
  %s4 = inlined_call_operand.vmem [shape: f32[1,32], index: 4, kind: input, shape index: {}]
  %s5 = inlined_call_operand.hbm [shape: f32[16,32], index: 5, kind: output, shape index: {}]
  %s6 = sld [smem:[#allocation0]]
  $region30: #{tpu_custom_call.1} parent=0
    _
  %s8 = ssub.s32 1, %s6
  %s9 = scalar_select 0, %s8, %s6
  $region1: #{tpu_custom_call.1} parent=0
    #allocation2 [shape = 'u8[8192]{0}', space=vmem, size = 0x2000, scoped, tag = 'output window, operand 0, single buffered']
    #allocation3 [shape = 's32[1]{0}', space=sflag, size = 0x4, scoped, tag = 'scoped memory for tpu_custom_call.1']
    %10 = vsyncpa [#allocation3], 0
    // Predicated region
    $region2: #{tpu_custom_call.1} parent=1 // pred_check
      _
    $region3: #{tpu_custom_call.1} parent=1 // pred_check_branch
      %12 = sbr.rel (0) target = $region5
    $region4: #{tpu_custom_call.1} parent=1 // pred_region
      _
    $region5: #{tpu_custom_call.1} parent=1 // pred_fallthru
      _
    // Predicated region
    $region6: #{tpu_custom_call.1} parent=1 // pred_check
      _
    $region7: #{tpu_custom_call.1} parent=1 // pred_check_branch
      %14 = sbr.rel (0) target = $region9
    $region8: #{tpu_custom_call.1} parent=1 // pred_region
      _
    $region9: #{tpu_custom_call.1} parent=1 // pred_fallthru
      _
    // Predicated region
    $region10: #{tpu_custom_call.1} parent=1 // pred_check
      _
    $region11: #{tpu_custom_call.1} parent=1 // pred_check_branch
      %16 = sbr.rel (0) target = $region13
    $region12: #{tpu_custom_call.1} parent=1 // pred_region
      _
    $region13: #{tpu_custom_call.1} parent=1 // pred_fallthru
      _
    // Predicated region
    $region14: #{tpu_custom_call.1} parent=1 // pred_check
      _
    $region15: #{tpu_custom_call.1} parent=1 // pred_check_branch
      %18 = sbr.rel (0) target = $region17
    $region16: #{tpu_custom_call.1} parent=1 // pred_region
      _
    $region17: #{tpu_custom_call.1} parent=1 // pred_fallthru
      _
    // Predicated region
    $region18: #{tpu_custom_call.1} parent=1 // pred_check
      _
    $region19: #{tpu_custom_call.1} parent=1 // pred_check_branch
      %20 = sbr.rel (0) target = $region21
    $region20: #{tpu_custom_call.1} parent=1 // pred_region
      _
    $region21: #{tpu_custom_call.1} parent=1 // pred_fallthru
      _
    %v21 = vld [vmem:[%s0] sm:$0xff]
    %v22 = vld [vmem:[%s0 + $0x8] sm:$0xff]
    %v23 = vld [vmem:[%s1] sm:$0xff]
    %v24 = vld [vmem:[%s1 + $0x8] sm:$0xff]
    %v25 = vld [vmem:[%s1 + $0x10] sm:$0xff]
    %v26 = vld [vmem:[%s1 + $0x18] sm:$0xff]
    %v27 = vld [vmem:[%s3] sm:$0xff]
    %v28 = vld [vmem:[%s3 + $0x8] sm:$0xff]
    %v29 = vld [vmem:[%s3 + $0x10] sm:$0xff]
    %v30 = vld [vmem:[%s3 + $0x18] sm:$0xff]
    %v31 = vld [vmem:[%s3 + $0x20] sm:$0xff]
    %v32 = vld [vmem:[%s3 + $0x28] sm:$0xff]
    %v33 = vld [vmem:[%s3 + $0x30] sm:$0xff]
    %v34 = vld [vmem:[%s3 + $0x38] sm:$0xff]
    %v35 = vld [vmem:[%s3 + $0x40] sm:$0xff]
    %v36 = vld [vmem:[%s3 + $0x48] sm:$0xff]
    %v37 = vld [vmem:[%s3 + $0x50] sm:$0xff]
    %v38 = vld [vmem:[%s3 + $0x58] sm:$0xff]
    %v39 = vld [vmem:[%s3 + $0x60] sm:$0xff]
    %v40 = vld [vmem:[%s3 + $0x68] sm:$0xff]
    %v41 = vld [vmem:[%s3 + $0x70] sm:$0xff]
    %v42 = vld [vmem:[%s3 + $0x78] sm:$0xff]
    %v43 = vld [vmem:[%s2] sm:$0x1]
    %v45 = vlaneseq
    %v46 = vshrl.u32 %v45, 7
    %v47 = vsub.s32 0, %v46
    %v48 = vrot.slane %v43, %v47
    %vm50 = vcmask 261120
    %v52 = vsel %vm50, %v21, 0
    %v55 = vsel %vm50, %v22, 0
    %57 = vmatprep.subr.mxu0 0.0
    %58 = vmatpush1.msra.mxu0 %v23
    %59 = vmatprep.subr.mxu0 0.0
    %60 = vmatpush1.msra.mxu0 %v24
    %61 = vmatprep.subr.mxu0 0.0
    %62 = vmatpush1.msra.mxu0 %v25
    %63 = vmatprep.subr.mxu0 0.0
    %64 = vmatpush1.msra.mxu0 %v26
    %65 = vmatprep.subr.mxu0 0.0
    %66 = vmatpush1.msra.mxu0 0.0
    %67 = vmatprep.subr.mxu0 0.0
    %68 = vmatpush1.msra.mxu0 0.0
    %69 = vmatprep.subr.mxu0 0.0
    %70 = vmatpush1.msra.mxu0 0.0
    %71 = vmatprep.subr.mxu0 0.0
    %72 = vmatpush1.msra.mxu0 0.0
    %73 = vmatprep.subr.mxu0 0.0
    %74 = vmatpush1.msra.mxu0 0.0
    %75 = vmatprep.subr.mxu0 0.0
    %76 = vmatpush1.msra.mxu0 0.0
    %77 = vmatprep.subr.mxu0 0.0
    %78 = vmatpush1.msra.mxu0 0.0
    %79 = vmatprep.subr.mxu0 0.0
    %80 = vmatpush1.msra.mxu0 0.0
    %81 = vmatprep.subr.mxu0 0.0
    %82 = vmatpush1.msra.mxu0 0.0
    %83 = vmatprep.subr.mxu0 0.0
    %84 = vmatpush1.msra.mxu0 0.0
    %85 = vmatprep.subr.mxu0 0.0
    %86 = vmatpush1.msra.mxu0 0.0
    %87 = vmatprep.subr.mxu0 0.0
    %88 = vmatpush1.msra.mxu0 0.0
    %89 = vmatprep.subr.mxu0 0.0
    %90 = vmatpush1.msra.mxu0 0.0
    %91 = vmatprep.subr.mxu0 0.0
    %92 = vmatpush1.msra.mxu0 0.0
    %93 = vmatprep.subr.mxu0 0.0
    %94 = vmatpush1.msra.mxu0 0.0
    %95 = vmatprep.subr.mxu0 0.0
    %96 = vmatpush1.msra.mxu0 0.0
    %97 = vmatprep.subr.mxu0 0.0
    %98 = vmatpush1.msra.mxu0 0.0
    %99 = vmatprep.subr.mxu0 0.0
    %100 = vmatpush1.msra.mxu0 0.0
    %101 = vmatprep.subr.mxu0 0.0
    %102 = vmatpush1.msra.mxu0 0.0
    %103 = vmatprep.subr.mxu0 0.0
    %104 = vmatpush1.msra.mxu0 0.0
    %105 = vmatprep.subr.mxu0 0.0
    %106 = vmatpush1.msra.mxu0 0.0
    %107 = vmatprep.subr.mxu0 0.0
    %108 = vmatpush1.msra.mxu0 0.0
    %109 = vmatprep.subr.mxu0 0.0
    %110 = vmatpush1.msra.mxu0 0.0
    %111 = vmatprep.subr.mxu0 0.0
    %112 = vmatpush1.msra.mxu0 0.0
    %113 = vmatprep.subr.mxu0 0.0
    %114 = vmatpush1.msra.mxu0 0.0
    %115 = vmatprep.subr.mxu0 0.0
    %116 = vmatpush1.msra.mxu0 0.0
    %117 = vmatprep.subr.mxu0 0.0
    %118 = vmatpush1.msra.mxu0 0.0
    %119 = vmatprep.subr.mxu0 0.0
    %120 = vmatpush1.msra.mxu0 0.0
    %121 = vmatprep.mubr.f32.mxu0 0.0
    %122 = vmatmul.mubr.f32.gmra.mrb[0].mxu0 %v52
    %v123 = vpop.f32.mrb[0].mxu0
    %v124 = vadd.f32 %v48, %v123
    %v125 = vpop.f32.mrb[0].mxu0
    %126 = vmatprep.mubr.f32.mxu0 0.0
    %127 = vmatmul.mubr.f32.gmra.mrb[0].mxu0 %v55
    %v128 = vpop.f32.mrb[0].mxu0
    %v129 = vadd.f32 %v48, %v128
    %v130 = vpop.f32.mrb[0].mxu0
    %131 = vdwg.mxu0
    %v132 = vmul.f32 %v124, 0.5
    %v133 = vmul.f32 %v129, 0.5
    %v134 = vmul.f32 %v124, 0.70710677
    %v135 = vmul.f32 %v129, 0.70710677
    %v136 = vand.u32 2147483647, %v134
    %v137 = vand.u32 2147483647, %v135
    %v138 = vmul.f32 %v136, 0.3275911
    %v139 = vmul.f32 %v137, 0.3275911
    %v140 = vadd.f32 %v138, 1.0
    %v141 = vadd.f32 %v139, 1.0
    %v142 = vrcp.pop %v140
    %v143 = vmul.f32 1.0, %v142
    %v144 = vrcp.pop %v141
    %v145 = vmul.f32 1.0, %v144
    %v146 = vmul.f32 %v143, 1.0614054
    %v147 = vmul.f32 %v145, 1.0614054
    %v148 = vadd.f32 %v146, -1.4531521
    %v149 = vadd.f32 %v147, -1.4531521
    %v150 = vmul.f32 %v148, %v143
    %v151 = vmul.f32 %v149, %v145
    %v152 = vadd.f32 %v150, 1.4214138
    %v153 = vadd.f32 %v151, 1.4214138
    %v154 = vmul.f32 %v152, %v143
    %v155 = vmul.f32 %v153, %v145
    %v156 = vadd.f32 %v154, -0.28449672
    %v157 = vadd.f32 %v155, -0.28449672
    %v158 = vmul.f32 %v156, %v143
    %v159 = vmul.f32 %v157, %v145
    %v160 = vadd.f32 %v158, 0.2548296
    %v161 = vadd.f32 %v159, 0.2548296
    %v162 = vmul.f32 %v160, %v143
    %v163 = vmul.f32 %v161, %v145
    %v164 = vsub.f32 0.0, %v136
    %v165 = vsub.f32 0.0, %v137
    %v166 = vmul.f32 %v164, %v136
    %v167 = vmul.f32 %v165, %v137
    %v168 = vmul.f32 %v166, 1.442695
    %v169 = vpow.pop %v168
    %v170 = vmul.f32 %v167, 1.442695
    %v171 = vpow.pop %v170
    %v172 = vmul.f32 %v162, %v169
    %v173 = vmul.f32 %v163, %v171
    %v174 = vsub.f32 1.0, %v172
    %v175 = vsub.f32 1.0, %v173
    %vm176 = vcmp.lt.f32.partialorder %v134, 0.0
    %vm177 = vcmp.lt.f32.partialorder %v135, 0.0
    %v178 = vsub.f32 0.0, %v174
    %v179 = vsub.f32 0.0, %v175
    %v180 = vsel %vm176, %v178, %v174
    %v181 = vsel %vm177, %v179, %v175
    %v182 = vadd.f32 %v180, 1.0
    %v183 = vadd.f32 %v181, 1.0
    %v184 = vmul.f32 %v132, %v182
    %v185 = vmul.f32 %v133, %v183
    %v186 = vld [vmem:[%s4] sm:$0x1]
    %v188 = vlaneseq
    %v189 = vshrl.u32 %v188, 7
    %v190 = vsub.s32 0, %v189
    %v191 = vrot.slane %v186, %v190
    %193 = vmatprep.subr.mxu0 0.0
    %194 = vmatpush1.msra.mxu0 %v27
    %195 = vmatprep.subr.mxu0 0.0
    %196 = vmatpush1.msra.mxu0 %v28
    %197 = vmatprep.subr.mxu0 0.0
    %198 = vmatpush1.msra.mxu0 %v29
    %199 = vmatprep.subr.mxu0 0.0
    %200 = vmatpush1.msra.mxu0 %v30
    %201 = vmatprep.subr.mxu0 0.0
    %202 = vmatpush1.msra.mxu0 %v31
    %203 = vmatprep.subr.mxu0 0.0
    %204 = vmatpush1.msra.mxu0 %v32
    %205 = vmatprep.subr.mxu0 0.0
    %206 = vmatpush1.msra.mxu0 %v33
    %207 = vmatprep.subr.mxu0 0.0
    %208 = vmatpush1.msra.mxu0 %v34
    %209 = vmatprep.subr.mxu0 0.0
    %210 = vmatpush1.msra.mxu0 %v35
    %211 = vmatprep.subr.mxu0 0.0
    %212 = vmatpush1.msra.mxu0 %v36
    %213 = vmatprep.subr.mxu0 0.0
    %214 = vmatpush1.msra.mxu0 %v37
    %215 = vmatprep.subr.mxu0 0.0
    %216 = vmatpush1.msra.mxu0 %v38
    %217 = vmatprep.subr.mxu0 0.0
    %218 = vmatpush1.msra.mxu0 %v39
    %219 = vmatprep.subr.mxu0 0.0
    %220 = vmatpush1.msra.mxu0 %v40
    %221 = vmatprep.subr.mxu0 0.0
    %222 = vmatpush1.msra.mxu0 %v41
    %223 = vmatprep.subr.mxu0 0.0
    %224 = vmatpush1.msra.mxu0 %v42
    %225 = vmatprep.subr.mxu0 0.0
    %226 = vmatpush1.msra.mxu0 0.0
    %227 = vmatprep.subr.mxu0 0.0
    %228 = vmatpush1.msra.mxu0 0.0
    %229 = vmatprep.subr.mxu0 0.0
    %230 = vmatpush1.msra.mxu0 0.0
    %231 = vmatprep.subr.mxu0 0.0
    %232 = vmatpush1.msra.mxu0 0.0
    %233 = vmatprep.subr.mxu0 0.0
    %234 = vmatpush1.msra.mxu0 0.0
    %235 = vmatprep.subr.mxu0 0.0
    %236 = vmatpush1.msra.mxu0 0.0
    %237 = vmatprep.subr.mxu0 0.0
    %238 = vmatpush1.msra.mxu0 0.0
    %239 = vmatprep.subr.mxu0 0.0
    %240 = vmatpush1.msra.mxu0 0.0
    %241 = vmatprep.subr.mxu0 0.0
    %242 = vmatpush1.msra.mxu0 0.0
    %243 = vmatprep.subr.mxu0 0.0
    %244 = vmatpush1.msra.mxu0 0.0
    %245 = vmatprep.subr.mxu0 0.0
    %246 = vmatpush1.msra.mxu0 0.0
    %247 = vmatprep.subr.mxu0 0.0
    %248 = vmatpush1.msra.mxu0 0.0
    %249 = vmatprep.subr.mxu0 0.0
    %250 = vmatpush1.msra.mxu0 0.0
    %251 = vmatprep.subr.mxu0 0.0
    %252 = vmatpush1.msra.mxu0 0.0
    %253 = vmatprep.subr.mxu0 0.0
    %254 = vmatpush1.msra.mxu0 0.0
    %255 = vmatprep.subr.mxu0 0.0
    %256 = vmatpush1.msra.mxu0 0.0
    %257 = vmatprep.mubr.f32.mxu0 0.0
    %258 = vmatmul.mubr.f32.gmra.mrb[0].mxu0 %v184
    %v259 = vpop.f32.mrb[0].mxu0
    %v260 = vadd.f32 %v191, %v259
    %v261 = vpop.f32.mrb[0].mxu0
    %262 = vmatprep.mubr.f32.mxu0 0.0
    %263 = vmatmul.mubr.f32.gmra.mrb[0].mxu0 %v185
    %v264 = vpop.f32.mrb[0].mxu0
    %v265 = vadd.f32 %v191, %v264
    %v266 = vpop.f32.mrb[0].mxu0
    %267 = vdwg.mxu0
    %268 = vst.msk [vmem:[#allocation2] sm:$0xff] %vm50, %v260
    %269 = vst.msk [vmem:[#allocation2 + $0x8] sm:$0xff] %vm50, %v265
    // Predicated region
    $region22: #{tpu_custom_call.1} parent=1 // pred_check
      _
    $region23: #{tpu_custom_call.1} parent=1 // pred_check_branch
      %271 = sbr.rel (0) target = $region25
    $region24: #{tpu_custom_call.1} parent=1 // pred_region
      %s273 = ssub.s32 256, 256
      %274 = vsyncadd [#allocation3], %s273
      %s275 = sshll.u32 [#allocation2], 4
      %s276 = int_to_ptr.vmem [resolvable:$true] %s275
      %281 = dma.vmem_to_hbm [thread:$0]  %s276, 256, %s5, [#allocation3], 128, 128, 8
    $region25: #{tpu_custom_call.1} parent=1 // pred_fallthru
      _
    // Predicated region
    $region26: #{tpu_custom_call.1} parent=1 // pred_check
      _
    $region27: #{tpu_custom_call.1} parent=1 // pred_check_branch
      %283 = sbr.rel (0) target = $region29
    $region28: #{tpu_custom_call.1} parent=1 // pred_region
      %284 = dma.done [#allocation3], 256
    $region29: #{tpu_custom_call.1} parent=1 // pred_fallthru
      _
    %285 = vsyncpa [#allocation3], 1

</llo_original>
